<compile_context>
chip_gen: v7x
topology: tpu7x:2x2x1
jax: 0.10.0
libtpu: 0.0.40
codegen_flags: <defaults>
</compile_context>

<pallas_src>
import functools

import jax
import jax.numpy as jnp
from jax.experimental import pallas as pl
from jax.experimental.pallas import tpu as pltpu


def _make_neck_kernel(nb, use_bf16_matmul):
    """Kernel over a (nb, C_in, TM) pixel slab -> (nb, L, TM) output slab."""

    def kernel(x_ref, w1_ref, b1_ref, w2_ref, b2_ref, o_ref):
        # Hoist weight/bias loads out of the (small, static) batch-fold loop.
        w1 = w1_ref[...]          # (L, C_in)
        w2 = w2_ref[...]          # (L, L)
        b1 = b1_ref[...]          # (L, 1)
        b2 = b2_ref[...]          # (L, 1)
        if use_bf16_matmul:
            w1 = w1.astype(jnp.bfloat16)
            w2 = w2.astype(jnp.bfloat16)

        for n in range(nb):       # nb is a small static constant (<= 8)
            x = x_ref[n]          # (C_in, TM), pixels on lanes
            if use_bf16_matmul:
                x = x.astype(jnp.bfloat16)
            h = jnp.dot(w1, x, preferred_element_type=jnp.float32) + b1
            h = jnp.maximum(h, 0.0)                       # bias + ReLU
            if use_bf16_matmul:
                h = h.astype(jnp.bfloat16)
            y = jnp.dot(w2, h, preferred_element_type=jnp.float32) + b2
            # sigmoid(y) == 0.5*(tanh(0.5*y)+1): single EUP push, no divide.
            o_ref[n] = (0.5 * (jnp.tanh(0.5 * y) + 1.0)).astype(o_ref.dtype)

    return kernel


def _round_down_128(v):
    return max(128, (v // 128) * 128)


def _choose_tiling(N, HW, tile_pixels, max_unroll=8):
    """Pick (nb, tm): images folded per step, pixel-tile width."""
    if HW > tile_pixels:
        nb = 1
        tm = _round_down_128(tile_pixels)
    else:
        tm = HW
        nb = max(1, min(N, tile_pixels // max(HW, 1), max_unroll))
    # Ensure >= 2 grid steps whenever possible so both v7x TensorCores are
    # used (harmless single extra step on v5e/v6e).
    steps = pl.cdiv(N, nb) * pl.cdiv(HW, tm)
    if steps < 2:
        if nb > 1:
            nb = max(1, nb // 2)
        elif tm >= 256:
            tm = _round_down_128(tm // 2)
    return nb, tm


@functools.partial(
    jax.jit, static_argnames=("tile_pixels", "out_dtype", "bf16_matmul"))
def ppn_conv_neck(feats, w1, b1, w2, b2, *, tile_pixels=16384,
                  out_dtype=jnp.float32, bf16_matmul=False):
    """feats: (N, C_in, H, W) float32.  Returns (N, L, H, W) out_dtype.

    w1: (L, C_in) conv1 weight (kernel_size=1 squeezed), b1: (L,)
    w2: (L, L)    conv2 weight,                           b2: (L,)

    out_dtype=jnp.bfloat16 halves the dominant output-write HBM traffic
    (~1.8-2x on v5e/v6e); bf16_matmul casts MXU operands to bf16 with f32
    accumulation (v7x lever). Both break strict 1e-5 parity, so they default
    off.
    """
    N, C_in, H, W = feats.shape
    L = w1.shape[0]
    HW = H * W

    # NCHW -> (N, C_in, H*W): a pure reshape, no transpose, no HBM copy.
    x3d = feats.reshape(N, C_in, HW)

    nb, tm = _choose_tiling(N, HW, tile_pixels)
    grid = (pl.cdiv(N, nb), pl.cdiv(HW, tm))

    b1r = b1.reshape(L, 1)
    b2r = b2.reshape(L, 1)

    out_itemsize = jnp.dtype(out_dtype).itemsize
    in_itemsize = jnp.dtype(feats.dtype).itemsize

    # Scoped-VMEM hint with headroom: double-buffered input + output tiles.
    pad8 = lambda v: ((v + 7) // 8) * 8
    tile_bytes = nb * tm * (pad8(C_in) * in_itemsize + pad8(L) * out_itemsize)
    vmem_limit = int(min(max(2 * tile_bytes + (4 << 20), 32 << 20), 128 << 20))

    cost = pl.CostEstimate(
        flops=2 * N * HW * (L * C_in + L * L),
        transcendentals=N * HW * L,
        bytes_accessed=(N * HW * C_in * in_itemsize
                        + N * HW * L * out_itemsize
                        + (L * C_in + L * L + 2 * L) * 4),
    )

    out3d = pl.pallas_call(
        _make_neck_kernel(nb, bf16_matmul),
        out_shape=jax.ShapeDtypeStruct((N, L, HW), out_dtype),
        grid=grid,
        in_specs=[
            pl.BlockSpec((nb, C_in, tm), lambda b, p: (b, 0, p)),
            pl.BlockSpec((L, C_in), lambda b, p: (0, 0)),
            pl.BlockSpec((L, 1), lambda b, p: (0, 0)),
            pl.BlockSpec((L, L), lambda b, p: (0, 0)),
            pl.BlockSpec((L, 1), lambda b, p: (0, 0)),
        ],
        out_specs=pl.BlockSpec((nb, L, tm), lambda b, p: (b, 0, p)),
        compiler_params=pltpu.CompilerParams(
            dimension_semantics=("parallel", "parallel"),
            vmem_limit_bytes=vmem_limit),
        cost_estimate=cost,
    )(x3d, w1, b1r, w2, b2r)

    # (N, L, H*W) -> NCHW with a pure reshape.
    return out3d.reshape(N, L, H, W)


def _reference(feats, w1, b1, w2, b2):
    # Pure-JAX reference of the PyTorch module (1x1 convs as einsums).
    h = jnp.einsum("nchw,lc->nlhw", feats, w1) + b1[None, :, None, None]
    h = jnp.maximum(h, 0.0)
    y = jnp.einsum("nchw,lc->nlhw", h, w2) + b2[None, :, None, None]
    return jax.nn.sigmoid(y)


if __name__ == "__main__":
    # Small shapes consistent with the module's forward:
    # backbone feature map (N, C_in, H, W) with latent_channels = L.
    N, C_in, H, W = 2, 4, 16, 16
    L = 32

    key = jax.random.PRNGKey(0)
    k_x, k_w1, k_b1, k_w2, k_b2 = jax.random.split(key, 5)

    feats = jax.random.normal(k_x, (N, C_in, H, W), dtype=jnp.float32)

    # Deterministic parameter init (PyTorch-style uniform bounds for 1x1 conv).
    bound1 = 1.0 / (C_in ** 0.5)
    w1 = jax.random.uniform(k_w1, (L, C_in), jnp.float32, -bound1, bound1)
    b1 = jax.random.uniform(k_b1, (L,), jnp.float32, -bound1, bound1)
    bound2 = 1.0 / (L ** 0.5)
    w2 = jax.random.uniform(k_w2, (L, L), jnp.float32, -bound2, bound2)
    b2 = jax.random.uniform(k_b2, (L,), jnp.float32, -bound2, bound2)

    out = ppn_conv_neck(feats, w1, b1, w2, b2)
    out = jax.block_until_ready(out)

    ref = _reference(feats, w1, b1, w2, b2)
    assert out.shape == (N, L, H, W), out.shape
    assert jnp.allclose(out, ref, atol=1e-5, rtol=1e-5), float(
        jnp.max(jnp.abs(out - ref)))

    print("KERNEL_OK")
</pallas_src>

<mosaic_0001>
module attributes {stable_mosaic.version = 11 : i64} {
  func.func @kernel(%arg0: i32, %arg1: i32, %arg2: memref<1x4x256xf32, #tpu.memory_space<vmem>>, %arg3: memref<32x4xf32, #tpu.memory_space<vmem>>, %arg4: memref<32x1xf32, #tpu.memory_space<vmem>>, %arg5: memref<32x32xf32, #tpu.memory_space<vmem>>, %arg6: memref<32x1xf32, #tpu.memory_space<vmem>>, %arg7: memref<1x32x256xf32, #tpu.memory_space<vmem>>) attributes {dimension_semantics = [#tpu.dimension_semantics<parallel>, #tpu.dimension_semantics<parallel>], iteration_bounds = array<i64: 2, 1>, scalar_prefetch = 0 : i64, scratch_operands = 0 : i64, tpu.core_type = #tpu.core_type<tc>, window_params = [{transform_indices = @transform_0, window_bounds = array<i64: 1, 4, 256>}, {pipeline_mode = #tpu.pipeline_mode<synchronous>, transform_indices = @transform_1, window_bounds = array<i64: 32, 4>}, {pipeline_mode = #tpu.pipeline_mode<synchronous>, transform_indices = @transform_2, window_bounds = array<i64: 32, 1>}, {pipeline_mode = #tpu.pipeline_mode<synchronous>, transform_indices = @transform_3, window_bounds = array<i64: 32, 32>}, {pipeline_mode = #tpu.pipeline_mode<synchronous>, transform_indices = @transform_4, window_bounds = array<i64: 32, 1>}, {transform_indices = @transform_5, window_bounds = array<i64: 1, 32, 256>}]} {
    %c0 = arith.constant 0 : index
    %c0_0 = arith.constant 0 : index
    %0 = vector.load %arg3[%c0, %c0_0] : memref<32x4xf32, #tpu.memory_space<vmem>>, vector<32x4xf32>
    %c0_1 = arith.constant 0 : index
    %c0_2 = arith.constant 0 : index
    %1 = vector.load %arg5[%c0_1, %c0_2] : memref<32x32xf32, #tpu.memory_space<vmem>>, vector<32x32xf32>
    %c0_3 = arith.constant 0 : index
    %c0_4 = arith.constant 0 : index
    %2 = vector.load %arg4[%c0_3, %c0_4] : memref<32x1xf32, #tpu.memory_space<vmem>>, vector<32x1xf32>
    %c0_5 = arith.constant 0 : index
    %c0_6 = arith.constant 0 : index
    %3 = vector.load %arg6[%c0_5, %c0_6] : memref<32x1xf32, #tpu.memory_space<vmem>>, vector<32x1xf32>
    %c0_7 = arith.constant 0 : index
    %c0_8 = arith.constant 0 : index
    %c0_9 = arith.constant 0 : index
    %4 = vector.load %arg2[%c0_7, %c0_8, %c0_9] : memref<1x4x256xf32, #tpu.memory_space<vmem>>, vector<1x4x256xf32>
    %5 = vector.shape_cast %4 : vector<1x4x256xf32> to vector<4x256xf32>
    %cst = arith.constant dense<0.000000e+00> : vector<32x256xf32>
    %6 = tpu.matmul %0, %5, %cst {dimension_numbers = #tpu.dot_dimension_numbers<[1], [0], [0], [1], [0, 0, 1, 1], [], []>} : vector<32x4xf32>, vector<4x256xf32>, vector<32x256xf32> -> vector<32x256xf32>
    %7 = vector.broadcast %2 : vector<32x1xf32> to vector<32x256xf32>
    %8 = arith.addf %6, %7 : vector<32x256xf32>
    %cst_10 = arith.constant 0.000000e+00 : f32
    %9 = vector.broadcast %cst_10 : f32 to vector<32x256xf32>
    %10 = arith.maximumf %8, %9 : vector<32x256xf32>
    %cst_11 = arith.constant dense<0.000000e+00> : vector<32x256xf32>
    %11 = tpu.matmul %1, %10, %cst_11 {dimension_numbers = #tpu.dot_dimension_numbers<[1], [0], [0], [1], [0, 0, 1, 1], [], []>} : vector<32x32xf32>, vector<32x256xf32>, vector<32x256xf32> -> vector<32x256xf32>
    %12 = vector.broadcast %3 : vector<32x1xf32> to vector<32x256xf32>
    %13 = arith.addf %11, %12 : vector<32x256xf32>
    %cst_12 = arith.constant 5.000000e-01 : f32
    %14 = vector.broadcast %cst_12 : f32 to vector<32x256xf32>
    %15 = arith.mulf %14, %13 : vector<32x256xf32>
    %16 = math.tanh %15 : vector<32x256xf32>
    %cst_13 = arith.constant 1.000000e+00 : f32
    %17 = vector.broadcast %cst_13 : f32 to vector<32x256xf32>
    %18 = arith.addf %16, %17 : vector<32x256xf32>
    %cst_14 = arith.constant 5.000000e-01 : f32
    %19 = vector.broadcast %cst_14 : f32 to vector<32x256xf32>
    %20 = arith.mulf %19, %18 : vector<32x256xf32>
    %c0_15 = arith.constant 0 : index
    %c0_16 = arith.constant 0 : index
    %c0_17 = arith.constant 0 : index
    %21 = vector.load %arg7[%c0_15, %c0_16, %c0_17] : memref<1x32x256xf32, #tpu.memory_space<vmem>>, vector<1x32x256xf32>
    %22 = vector.shape_cast %21 : vector<1x32x256xf32> to vector<32x256xf32>
    %23 = vector.shape_cast %20 : vector<32x256xf32> to vector<1x32x256xf32>
    tpu.vector_store %arg7[%c0_15, %c0_16, %c0_17], %23 {strides = array<i32>} : memref<1x32x256xf32, #tpu.memory_space<vmem>>, vector<1x32x256xf32>,
    return
  }
  func.func @transform_0(%arg0: i32, %arg1: i32) -> (i32, i32, i32) {
    %c0_i32 = arith.constant 0 : i32
    %c0_i32_0 = arith.constant 0 : i32
    return %arg0, %c0_i32, %arg1 : i32, i32, i32
  }
  func.func @transform_1(%arg0: i32, %arg1: i32) -> (i32, i32) {
    %c0_i32 = arith.constant 0 : i32
    %c0_i32_0 = arith.constant 0 : i32
    %c0_i32_1 = arith.constant 0 : i32
    return %c0_i32, %c0_i32_0 : i32, i32
  }
  func.func @transform_2(%arg0: i32, %arg1: i32) -> (i32, i32) {
    %c0_i32 = arith.constant 0 : i32
    %c0_i32_0 = arith.constant 0 : i32
    %c0_i32_1 = arith.constant 0 : i32
    return %c0_i32, %c0_i32_0 : i32, i32
  }
  func.func @transform_3(%arg0: i32, %arg1: i32) -> (i32, i32) {
    %c0_i32 = arith.constant 0 : i32
    %c0_i32_0 = arith.constant 0 : i32
    %c0_i32_1 = arith.constant 0 : i32
    return %c0_i32, %c0_i32_0 : i32, i32
  }
  func.func @transform_4(%arg0: i32, %arg1: i32) -> (i32, i32) {
    %c0_i32 = arith.constant 0 : i32
    %c0_i32_0 = arith.constant 0 : i32
    %c0_i32_1 = arith.constant 0 : i32
    return %c0_i32, %c0_i32_0 : i32, i32
  }
  func.func @transform_5(%arg0: i32, %arg1: i32) -> (i32, i32, i32) {
    %c0_i32 = arith.constant 0 : i32
    %c0_i32_0 = arith.constant 0 : i32
    return %arg0, %c0_i32, %arg1 : i32, i32, i32
  }
}

</mosaic_0001>

<llo_original>
// kernel: ppn_conv_neck.1
$region0: #{ppn_conv_neck.1}
  #allocation0 [shape = 'u32[]', space=smem, size = 0x4, offset = 0x4, fixed_abs, tag = 'smem constant byte address 0x4 - core index']
  #allocation1 [shape = 'u32[144,128]{1,0:T(1,128)}', space=vmem, size = 0x12000, scoped, tag = 'internal scratch']
  %s0 = inlined_call_operand.vmem [shape: f32[2,4,256], index: 0, kind: input, shape index: {}]
  %s1 = inlined_call_operand.vmem [shape: f32[32,4], index: 1, kind: input, shape index: {}]
  %s2 = inlined_call_operand.vmem [shape: f32[32,1], index: 2, kind: input, shape index: {}]
  %s3 = inlined_call_operand.vmem [shape: f32[32,32], index: 3, kind: input, shape index: {}]
  %s4 = inlined_call_operand.vmem [shape: f32[32,1], index: 4, kind: input, shape index: {}]
  %s5 = inlined_call_operand.vmem [shape: f32[2,32,256], index: 5, kind: output, shape index: {}]
  %s6 = sld [smem:[#allocation0]]
  $region53: #{ppn_conv_neck.1} parent=0
    _
  %s8 = ssub.s32 1, %s6
  %s9 = scalar_select 0, %s8, %s6
  loop: start=0, step=1, limit=4
  $region2: #{ppn_conv_neck.1} parent=0 // loop_pre_header
    _
  $region3: #{ppn_conv_neck.1} parent=0 // loop_header
    %s11 = sphi 0, %s15
    %p12 = scmp.ge.s32.totalorder %s11, 4
    %s18 = sphi 0, %s30
    %s19 = sphi 0, %s26
    %s20 = sphi 0, %s18
    %s21 = sphi 0, %s19
    %s22 = sphi 0, %s20
    %s23 = sphi 0, %s21
    %s35 = sphi 0, %s37
    %s38 = sphi 0, %s35
    %s39 = sphi 0, %s38
    %s55 = sphi 0, %s39
    %s59 = sphi 0, %s59
    %s61 = sphi 0, %s59
    %s62 = sphi 0, %s61
    %s76 = sphi 0, %s62
    %s80 = sphi 0, %s80
    %s82 = sphi 0, %s80
    %s83 = sphi 0, %s82
    %s97 = sphi 0, %s83
    %s101 = sphi 0, %s101
    %s103 = sphi 0, %s101
    %s104 = sphi 0, %s103
    %s118 = sphi 0, %s104
    %s122 = sphi 0, %s122
    %s124 = sphi 0, %s122
    %s125 = sphi 0, %s124
    %s139 = sphi 0, %s125
    %s147 = sphi 0, %s149
    %s150 = sphi 0, %s147
    %s151 = sphi 0, %s150
    %s167 = sphi 0, %s151
  $region4: #{ppn_conv_neck.1} parent=0 // loop_header_branch
    %14 = sbr.rel (%p12) target = $region8
  $region5: #{ppn_conv_neck.1} parent=0 // loop_body
    %s16 = ssub.s32 %s11, 1
    %s17 = ssub.s32 %s11, 2
    %s24 = sadd.s32 1, %s19
    %p25 = scmp.ge.s32.totalorder %s24, 1
    %s26 = scalar_select %p25, 0, %s24
    %s27 = sadd.s32 1, %s18
    %s28 = scalar_select %p25, %s27, %s18
    %p29 = scmp.ge.s32.totalorder %s28, 2
    %s30 = scalar_select %p29, 0, %s28
    %s31 = ssub.s32 %s18, %s30
    %s32 = ssub.s32 %s19, %s26
    %s33 = sor.u32 %s31, %s32
    %p34 = scmp.eq.s32.totalorder %s33, 0
    %s36 = sadd.s32 %s35, 1
    %s37 = scalar_select %p34, %s35, %s36
    %p40 = pneg %p34
    %p41 = scmp.eq.s32.totalorder %s11, 1
    %p42 = por %p40, %p41
    %p43 = scmp.ne.s32.totalorder %s35, %s38
    %p44 = scmp.eq.s32.totalorder %s11, 0
    %p45 = por %p43, %p44
    %p46 = scmp.ne.s32.totalorder %s35, %s38
    %p47 = scmp.eq.s32.totalorder %s16, 1
    %p48 = por %p46, %p47
    %p49 = scmp.ne.s32.totalorder %s38, %s39
    %p50 = scmp.eq.s32.totalorder %s16, 0
    %p51 = por %p49, %p50
    %p52 = scmp.ne.s32.totalorder %s38, %s39
    %p53 = scmp.eq.s32.totalorder %s17, 1
    %p54 = por %p52, %p53
    %p56 = scmp.ne.s32.totalorder %s39, %s55
    %p57 = scmp.eq.s32.totalorder %s17, 0
    %p58 = por %p56, %p57
    %s60 = sadd.s32 %s59, 1
    %p63 = scmp.eq.s32.totalorder %s11, 1
    %p64 = scmp.ne.s32.totalorder %s59, %s61
    %p65 = scmp.eq.s32.totalorder %s11, 0
    %p66 = por %p64, %p65
    %p67 = scmp.ne.s32.totalorder %s59, %s61
    %p68 = scmp.eq.s32.totalorder %s16, 1
    %p69 = por %p67, %p68
    %p70 = scmp.ne.s32.totalorder %s61, %s62
    %p71 = scmp.eq.s32.totalorder %s16, 0
    %p72 = por %p70, %p71
    %p73 = scmp.ne.s32.totalorder %s61, %s62
    %p74 = scmp.eq.s32.totalorder %s17, 1
    %p75 = por %p73, %p74
    %p77 = scmp.ne.s32.totalorder %s62, %s76
    %p78 = scmp.eq.s32.totalorder %s17, 0
    %p79 = por %p77, %p78
    %s81 = sadd.s32 %s80, 1
    %p84 = scmp.eq.s32.totalorder %s11, 1
    %p85 = scmp.ne.s32.totalorder %s80, %s82
    %p86 = scmp.eq.s32.totalorder %s11, 0
    %p87 = por %p85, %p86
    %p88 = scmp.ne.s32.totalorder %s80, %s82
    %p89 = scmp.eq.s32.totalorder %s16, 1
    %p90 = por %p88, %p89
    %p91 = scmp.ne.s32.totalorder %s82, %s83
    %p92 = scmp.eq.s32.totalorder %s16, 0
    %p93 = por %p91, %p92
    %p94 = scmp.ne.s32.totalorder %s82, %s83
    %p95 = scmp.eq.s32.totalorder %s17, 1
    %p96 = por %p94, %p95
    %p98 = scmp.ne.s32.totalorder %s83, %s97
    %p99 = scmp.eq.s32.totalorder %s17, 0
    %p100 = por %p98, %p99
    %s102 = sadd.s32 %s101, 1
    %p105 = scmp.eq.s32.totalorder %s11, 1
    %p106 = scmp.ne.s32.totalorder %s101, %s103
    %p107 = scmp.eq.s32.totalorder %s11, 0
    %p108 = por %p106, %p107
    %p109 = scmp.ne.s32.totalorder %s101, %s103
    %p110 = scmp.eq.s32.totalorder %s16, 1
    %p111 = por %p109, %p110
    %p112 = scmp.ne.s32.totalorder %s103, %s104
    %p113 = scmp.eq.s32.totalorder %s16, 0
    %p114 = por %p112, %p113
    %p115 = scmp.ne.s32.totalorder %s103, %s104
    %p116 = scmp.eq.s32.totalorder %s17, 1
    %p117 = por %p115, %p116
    %p119 = scmp.ne.s32.totalorder %s104, %s118
    %p120 = scmp.eq.s32.totalorder %s17, 0
    %p121 = por %p119, %p120
    %s123 = sadd.s32 %s122, 1
    %p126 = scmp.eq.s32.totalorder %s11, 1
    %p127 = scmp.ne.s32.totalorder %s122, %s124
    %p128 = scmp.eq.s32.totalorder %s11, 0
    %p129 = por %p127, %p128
    %p130 = scmp.ne.s32.totalorder %s122, %s124
    %p131 = scmp.eq.s32.totalorder %s16, 1
    %p132 = por %p130, %p131
    %p133 = scmp.ne.s32.totalorder %s124, %s125
    %p134 = scmp.eq.s32.totalorder %s16, 0
    %p135 = por %p133, %p134
    %p136 = scmp.ne.s32.totalorder %s124, %s125
    %p137 = scmp.eq.s32.totalorder %s17, 1
    %p138 = por %p136, %p137
    %p140 = scmp.ne.s32.totalorder %s125, %s139
    %p141 = scmp.eq.s32.totalorder %s17, 0
    %p142 = por %p140, %p141
    %s143 = ssub.s32 %s18, %s30
    %s144 = ssub.s32 %s19, %s26
    %s145 = sor.u32 %s143, %s144
    %p146 = scmp.eq.s32.totalorder %s145, 0
    %s148 = sadd.s32 %s147, 1
    %s149 = scalar_select %p146, %s147, %s148
    %p152 = pneg %p146
    %p153 = scmp.eq.s32.totalorder %s11, 1
    %p154 = por %p152, %p153
    %p155 = scmp.ne.s32.totalorder %s147, %s150
    %p156 = scmp.eq.s32.totalorder %s11, 0
    %p157 = por %p155, %p156
    %p158 = scmp.ne.s32.totalorder %s147, %s150
    %p159 = scmp.eq.s32.totalorder %s16, 1
    %p160 = por %p158, %p159
    %p161 = scmp.ne.s32.totalorder %s150, %s151
    %p162 = scmp.eq.s32.totalorder %s16, 0
    %p163 = por %p161, %p162
    %p164 = scmp.ne.s32.totalorder %s150, %s151
    %p165 = scmp.eq.s32.totalorder %s17, 1
    %p166 = por %p164, %p165
    %p168 = scmp.ne.s32.totalorder %s151, %s167
    %p169 = scmp.eq.s32.totalorder %s17, 0
    %p170 = por %p168, %p169
    %p171 = scmp.le.s32.totalorder 1, %s11
    %p172 = scmp.lt.s32.totalorder %s11, 3
    %p173 = pnand %p171, %p172
    %p174 = pneg %p173
    // Predicated region
    $region9: #{ppn_conv_neck.1} parent=5 // pred_check
      _
    $region10: #{ppn_conv_neck.1} parent=5 // pred_check_branch
      %176 = sbr.rel (%p173) target = $region12
    $region11: #{ppn_conv_neck.1} parent=5 // pred_region
      %s177 = ssub.s32 %s11, 1
      // Predicated region
      $region13: #{ppn_conv_neck.1} parent=11 // pred_check
        %p178 = pneg %p72
      $region14: #{ppn_conv_neck.1} parent=11 // pred_check_branch
        %180 = sbr.rel (%p178) target = $region16
      $region15: #{ppn_conv_neck.1} parent=11 // pred_region
        _
      $region16: #{ppn_conv_neck.1} parent=11 // pred_fallthru
        _
      // Predicated region
      $region17: #{ppn_conv_neck.1} parent=11 // pred_check
        %p181 = pneg %p93
      $region18: #{ppn_conv_neck.1} parent=11 // pred_check_branch
        %183 = sbr.rel (%p181) target = $region20
      $region19: #{ppn_conv_neck.1} parent=11 // pred_region
        _
      $region20: #{ppn_conv_neck.1} parent=11 // pred_fallthru
        _
      // Predicated region
      $region21: #{ppn_conv_neck.1} parent=11 // pred_check
        %p184 = pneg %p114
      $region22: #{ppn_conv_neck.1} parent=11 // pred_check_branch
        %186 = sbr.rel (%p184) target = $region24
      $region23: #{ppn_conv_neck.1} parent=11 // pred_region
        _
      $region24: #{ppn_conv_neck.1} parent=11 // pred_fallthru
        _
      // Predicated region
      $region25: #{ppn_conv_neck.1} parent=11 // pred_check
        %p187 = pneg %p135
      $region26: #{ppn_conv_neck.1} parent=11 // pred_check_branch
        %189 = sbr.rel (%p187) target = $region28
      $region27: #{ppn_conv_neck.1} parent=11 // pred_region
        _
      $region28: #{ppn_conv_neck.1} parent=11 // pred_fallthru
        _
    $region12: #{ppn_conv_neck.1} parent=5 // pred_fallthru
      _
    %p190 = scmp.lt.s32.totalorder %s11, 2
    // Predicated region
    $region29: #{ppn_conv_neck.1} parent=5 // pred_check
      %p191 = pneg %p190
    $region30: #{ppn_conv_neck.1} parent=5 // pred_check_branch
      %193 = sbr.rel (%p191) target = $region32
    $region31: #{ppn_conv_neck.1} parent=5 // pred_region
      // Predicated region
      $region33: #{ppn_conv_neck.1} parent=31 // pred_check
        %p194 = pneg %p45
      $region34: #{ppn_conv_neck.1} parent=31 // pred_check_branch
        %196 = sbr.rel (%p194) target = $region36
      $region35: #{ppn_conv_neck.1} parent=31 // pred_region
        %s197 = smul.u32 2, %s19
        %p198 = scmp.lt.s32.totalorder %s18, 1
        %s199 = scalar_select %p198, %s18, 1
        %p200 = scmp.lt.s32.totalorder %s197, 1
        %s201 = scalar_select %p200, %s197, 1
        %s202 = smul.addr %s199, 2
        %s203 = sadd.s32 %s201, %s202
        %s204 = smul.addr %s203, 4
        %s205 = scalar_lea.vmem %s0, %s204
        %s206 = smul.u32 2, %s19
      $region36: #{ppn_conv_neck.1} parent=31 // pred_fallthru
        _
    $region32: #{ppn_conv_neck.1} parent=5 // pred_fallthru
      _
    %p207 = scmp.le.s32.totalorder 1, %s11
    %p208 = scmp.lt.s32.totalorder %s11, 3
    %p209 = pnand %p207, %p208
    %p210 = pneg %p209
    // Predicated region
    $region37: #{ppn_conv_neck.1} parent=5 // pred_check
      _
    $region38: #{ppn_conv_neck.1} parent=5 // pred_check_branch
      %212 = sbr.rel (%p209) target = $region40
    $region39: #{ppn_conv_neck.1} parent=5 // pred_region
      %s213 = ssub.s32 %s11, 1
      %s214 = smul.u32 2, %s21
      %p215 = scmp.lt.s32.totalorder %s20, 1
      %s216 = scalar_select %p215, %s20, 1
      %p217 = scmp.lt.s32.totalorder %s214, 1
      %s218 = scalar_select %p217, %s214, 1
      %s219 = smul.addr %s216, 2
      %s220 = sadd.s32 %s218, %s219
      %s221 = smul.addr %s220, 4
      %s222 = scalar_lea.vmem %s0, %s221
      %p223 = pneg %p51
      %p224 = pneg %p48
      %p225 = pneg %p72
      %p226 = pneg %p69
      %p227 = pneg %p93
      %p228 = pneg %p90
      %p229 = pneg %p114
      %p230 = pneg %p111
      %p231 = pneg %p135
      %p232 = pneg %p132
      %p233 = pneg %p163
      %p234 = pneg %p160
      %s235 = smul.u32 2, %s21
      %p236 = scmp.lt.s32.totalorder %s20, 1
      %s237 = scalar_select %p236, %s20, 1
      %p238 = scmp.lt.s32.totalorder %s235, 1
      %s239 = scalar_select %p238, %s235, 1
      %s240 = smul.addr %s237, 8
      %s241 = sadd.s32 %s239, %s240
      %s242 = smul.addr %s241, 8
      %s243 = scalar_lea.vmem %s5, %s242
      %s244 = smul.u32 2, %s21
      %p245 = scmp.lt.s32.totalorder %s20, 1
      %s246 = scalar_select %p245, %s20, 1
      %p247 = scmp.lt.s32.totalorder %s244, 1
      %s248 = scalar_select %p247, %s244, 1
      %s249 = smul.addr %s246, 2
      %s250 = sadd.s32 %s248, %s249
      %s251 = smul.addr %s250, 4
      %s252 = scalar_lea.vmem %s0, %s251
      %s253 = smul.u32 2, %s21
      %s254 = smul.u32 2, %s21
      %p255 = scmp.lt.s32.totalorder %s20, 1
      %s256 = scalar_select %p255, %s20, 1
      %p257 = scmp.lt.s32.totalorder %s254, 1
      %s258 = scalar_select %p257, %s254, 1
      %s259 = smul.addr %s256, 8
      %s260 = sadd.s32 %s258, %s259
      %s261 = smul.addr %s260, 8
      %s262 = scalar_lea.vmem %s5, %s261
      %s263 = smul.u32 2, %s21
      %v264 = vld [vmem:[%s1] sm:$0xff]
      %v265 = vld [vmem:[%s1 + $0x8] sm:$0xff]
      %v266 = vld [vmem:[%s1 + $0x10] sm:$0xff]
      %v267 = vld [vmem:[%s1 + $0x18] sm:$0xff]
      %v268 = vld [vmem:[%s3] sm:$0xff]
      %v269 = vld [vmem:[%s3 + $0x8] sm:$0xff]
      %v270 = vld [vmem:[%s3 + $0x10] sm:$0xff]
      %v271 = vld [vmem:[%s3 + $0x18] sm:$0xff]
      %v272 = vld [vmem:[%s2] sm:$0xff]
      %v273 = vld [vmem:[%s2 + $0x8] sm:$0xff]
      %v274 = vld [vmem:[%s2 + $0x10] sm:$0xff]
      %v275 = vld [vmem:[%s2 + $0x18] sm:$0xff]
      %v276 = vld [vmem:[%s4] sm:$0xff]
      %v277 = vld [vmem:[%s4 + $0x8] sm:$0xff]
      %v278 = vld [vmem:[%s4 + $0x10] sm:$0xff]
      %v279 = vld [vmem:[%s4 + $0x18] sm:$0xff]
      %v280 = vld [vmem:[%s252] sm:$0xff]
      %282 = vset.pattern.permute.xlu0 0
      %283 = vperm.xlu0 %282, %v272
      %v284 = vpop.permute.xlu0 %283
      %287 = vset.pattern.permute.xlu0 0
      %288 = vperm.xlu0 %287, %v273
      %v289 = vpop.permute.xlu0 %288
      %292 = vset.pattern.permute.xlu0 0
      %293 = vperm.xlu0 %292, %v274
      %v294 = vpop.permute.xlu0 %293
      %297 = vset.pattern.permute.xlu0 0
      %298 = vperm.xlu0 %297, %v275
      %v299 = vpop.permute.xlu0 %298
      %v302 = vcombine.high %v280, %v280
      %vm303 = vcmask 31744
      %v305 = vsel %vm303, %v264, 0
      %v308 = vsel %vm303, %v265, 0
      %v311 = vsel %vm303, %v266, 0
      %v314 = vsel %vm303, %v267, 0
      %vm316 = vcmask 1043456
      %v317 = vsel %vm316, %v280, 0
      %v319 = vsel %vm316, %v302, 0
      %321 = vmatprep.subr.mxu0 %v319
      %322 = vmatpush1.msra.mxu0 %v317
      %323 = vmatprep.subr.mxu0 0.0
      %324 = vmatpush1.msra.mxu0 0.0
      %325 = vmatprep.subr.mxu0 0.0
      %326 = vmatpush1.msra.mxu0 0.0
      %327 = vmatprep.subr.mxu0 0.0
      %328 = vmatpush1.msra.mxu0 0.0
      %329 = vmatprep.subr.mxu0 0.0
      %330 = vmatpush1.msra.mxu0 0.0
      %331 = vmatprep.subr.mxu0 0.0
      %332 = vmatpush1.msra.mxu0 0.0
      %333 = vmatprep.subr.mxu0 0.0
      %334 = vmatpush1.msra.mxu0 0.0
      %335 = vmatprep.subr.mxu0 0.0
      %336 = vmatpush1.msra.mxu0 0.0
      %337 = vmatprep.subr.mxu0 0.0
      %338 = vmatpush1.msra.mxu0 0.0
      %339 = vmatprep.subr.mxu0 0.0
      %340 = vmatpush1.msra.mxu0 0.0
      %341 = vmatprep.subr.mxu0 0.0
      %342 = vmatpush1.msra.mxu0 0.0
      %343 = vmatprep.subr.mxu0 0.0
      %344 = vmatpush1.msra.mxu0 0.0
      %345 = vmatprep.subr.mxu0 0.0
      %346 = vmatpush1.msra.mxu0 0.0
      %347 = vmatprep.subr.mxu0 0.0
      %348 = vmatpush1.msra.mxu0 0.0
      %349 = vmatprep.subr.mxu0 0.0
      %350 = vmatpush1.msra.mxu0 0.0
      %351 = vmatprep.subr.mxu0 0.0
      %352 = vmatpush1.msra.mxu0 0.0
      %353 = vmatprep.subr.mxu0 0.0
      %354 = vmatpush1.msra.mxu0 0.0
      %355 = vmatprep.subr.mxu0 0.0
      %356 = vmatpush1.msra.mxu0 0.0
      %357 = vmatprep.subr.mxu0 0.0
      %358 = vmatpush1.msra.mxu0 0.0
      %359 = vmatprep.subr.mxu0 0.0
      %360 = vmatpush1.msra.mxu0 0.0
      %361 = vmatprep.subr.mxu0 0.0
      %362 = vmatpush1.msra.mxu0 0.0
      %363 = vmatprep.subr.mxu0 0.0
      %364 = vmatpush1.msra.mxu0 0.0
      %365 = vmatprep.subr.mxu0 0.0
      %366 = vmatpush1.msra.mxu0 0.0
      %367 = vmatprep.subr.mxu0 0.0
      %368 = vmatpush1.msra.mxu0 0.0
      %369 = vmatprep.subr.mxu0 0.0
      %370 = vmatpush1.msra.mxu0 0.0
      %371 = vmatprep.subr.mxu0 0.0
      %372 = vmatpush1.msra.mxu0 0.0
      %373 = vmatprep.subr.mxu0 0.0
      %374 = vmatpush1.msra.mxu0 0.0
      %375 = vmatprep.subr.mxu0 0.0
      %376 = vmatpush1.msra.mxu0 0.0
      %377 = vmatprep.subr.mxu0 0.0
      %378 = vmatpush1.msra.mxu0 0.0
      %379 = vmatprep.subr.mxu0 0.0
      %380 = vmatpush1.msra.mxu0 0.0
      %381 = vmatprep.subr.mxu0 0.0
      %382 = vmatpush1.msra.mxu0 0.0
      %383 = vmatprep.subr.mxu0 0.0
      %384 = vmatpush1.msra.mxu0 0.0
      %385 = vmatprep.mubr.f32.mxu0 0.0
      %386 = vmatmul.mubr.f32.gmra.mrb[0].mxu0 %v305
      %v387 = vpop.f32.mrb[0].mxu0
      %v388 = vadd.f32 %v284, %v387
      %v389 = vpop.f32.mrb[0].mxu0
      %v390 = vadd.f32 %v284, %v389
      %391 = vmatprep.mubr.f32.mxu0 0.0
      %392 = vmatmul.mubr.f32.gmra.mrb[0].mxu0 %v308
      %v393 = vpop.f32.mrb[0].mxu0
      %v394 = vadd.f32 %v289, %v393
      %v395 = vpop.f32.mrb[0].mxu0
      %v396 = vadd.f32 %v289, %v395
      %397 = vmatprep.mubr.f32.mxu0 0.0
      %398 = vmatmul.mubr.f32.gmra.mrb[0].mxu0 %v311
      %v399 = vpop.f32.mrb[0].mxu0
      %v400 = vadd.f32 %v294, %v399
      %v401 = vpop.f32.mrb[0].mxu0
      %v402 = vadd.f32 %v294, %v401
      %403 = vmatprep.mubr.f32.mxu0 0.0
      %404 = vmatmul.mubr.f32.gmra.mrb[0].mxu0 %v314
      %v405 = vpop.f32.mrb[0].mxu0
      %v406 = vadd.f32 %v299, %v405
      %v407 = vpop.f32.mrb[0].mxu0
      %v408 = vadd.f32 %v299, %v407
      %409 = vdwg.mxu0
      %v410 = vmax.f32 %v388, 0.0
      %v411 = vmax.f32 %v390, 0.0
      %v412 = vmax.f32 %v394, 0.0
      %v413 = vmax.f32 %v396, 0.0
      %v414 = vmax.f32 %v400, 0.0
      %v415 = vmax.f32 %v402, 0.0
      %v416 = vmax.f32 %v406, 0.0
      %v417 = vmax.f32 %v408, 0.0
      %419 = vset.pattern.permute.xlu0 0
      %420 = vperm.xlu0 %419, %v276
      %v421 = vpop.permute.xlu0 %420
      %424 = vset.pattern.permute.xlu0 0
      %425 = vperm.xlu0 %424, %v277
      %v426 = vpop.permute.xlu0 %425
      %429 = vset.pattern.permute.xlu0 0
      %430 = vperm.xlu0 %429, %v278
      %v431 = vpop.permute.xlu0 %430
      %434 = vset.pattern.permute.xlu0 0
      %435 = vperm.xlu0 %434, %v279
      %v436 = vpop.permute.xlu0 %435
      %vm438 = vcmask 261120
      %v440 = vsel %vm438, %v268, 0
      %v443 = vsel %vm438, %v269, 0
      %v446 = vsel %vm438, %v270, 0
      %v449 = vsel %vm438, %v271, 0
      %451 = vmatprep.subr.mxu0 %v411
      %452 = vmatpush1.msra.mxu0 %v410
      %453 = vmatprep.subr.mxu0 %v413
      %454 = vmatpush1.msra.mxu0 %v412
      %455 = vmatprep.subr.mxu0 %v415
      %456 = vmatpush1.msra.mxu0 %v414
      %457 = vmatprep.subr.mxu0 %v417
      %458 = vmatpush1.msra.mxu0 %v416
      %459 = vmatprep.subr.mxu0 0.0
      %460 = vmatpush1.msra.mxu0 0.0
      %461 = vmatprep.subr.mxu0 0.0
      %462 = vmatpush1.msra.mxu0 0.0
      %463 = vmatprep.subr.mxu0 0.0
      %464 = vmatpush1.msra.mxu0 0.0
      %465 = vmatprep.subr.mxu0 0.0
      %466 = vmatpush1.msra.mxu0 0.0
      %467 = vmatprep.subr.mxu0 0.0
      %468 = vmatpush1.msra.mxu0 0.0
      %469 = vmatprep.subr.mxu0 0.0
      %470 = vmatpush1.msra.mxu0 0.0
      %471 = vmatprep.subr.mxu0 0.0
      %472 = vmatpush1.msra.mxu0 0.0
      %473 = vmatprep.subr.mxu0 0.0
      %474 = vmatpush1.msra.mxu0 0.0
      %475 = vmatprep.subr.mxu0 0.0
      %476 = vmatpush1.msra.mxu0 0.0
      %477 = vmatprep.subr.mxu0 0.0
      %478 = vmatpush1.msra.mxu0 0.0
      %479 = vmatprep.subr.mxu0 0.0
      %480 = vmatpush1.msra.mxu0 0.0
      %481 = vmatprep.subr.mxu0 0.0
      %482 = vmatpush1.msra.mxu0 0.0
      %483 = vmatprep.subr.mxu0 0.0
      %484 = vmatpush1.msra.mxu0 0.0
      %485 = vmatprep.subr.mxu0 0.0
      %486 = vmatpush1.msra.mxu0 0.0
      %487 = vmatprep.subr.mxu0 0.0
      %488 = vmatpush1.msra.mxu0 0.0
      %489 = vmatprep.subr.mxu0 0.0
      %490 = vmatpush1.msra.mxu0 0.0
      %491 = vmatprep.subr.mxu0 0.0
      %492 = vmatpush1.msra.mxu0 0.0
      %493 = vmatprep.subr.mxu0 0.0
      %494 = vmatpush1.msra.mxu0 0.0
      %495 = vmatprep.subr.mxu0 0.0
      %496 = vmatpush1.msra.mxu0 0.0
      %497 = vmatprep.subr.mxu0 0.0
      %498 = vmatpush1.msra.mxu0 0.0
      %499 = vmatprep.subr.mxu0 0.0
      %500 = vmatpush1.msra.mxu0 0.0
      %501 = vmatprep.subr.mxu0 0.0
      %502 = vmatpush1.msra.mxu0 0.0
      %503 = vmatprep.subr.mxu0 0.0
      %504 = vmatpush1.msra.mxu0 0.0
      %505 = vmatprep.subr.mxu0 0.0
      %506 = vmatpush1.msra.mxu0 0.0
      %507 = vmatprep.subr.mxu0 0.0
      %508 = vmatpush1.msra.mxu0 0.0
      %509 = vmatprep.subr.mxu0 0.0
      %510 = vmatpush1.msra.mxu0 0.0
      %511 = vmatprep.subr.mxu0 0.0
      %512 = vmatpush1.msra.mxu0 0.0
      %513 = vmatprep.subr.mxu0 0.0
      %514 = vmatpush1.msra.mxu0 0.0
      %515 = vmatprep.mubr.f32.mxu0 0.0
      %516 = vmatmul.mubr.f32.gmra.mrb[0].mxu0 %v440
      %v517 = vpop.f32.mrb[0].mxu0
      %v518 = vadd.f32 %v421, %v517
      %v519 = vpop.f32.mrb[0].mxu0
      %v520 = vadd.f32 %v421, %v519
      %521 = vmatprep.mubr.f32.mxu0 0.0
      %522 = vmatmul.mubr.f32.gmra.mrb[0].mxu0 %v443
      %v523 = vpop.f32.mrb[0].mxu0
      %v524 = vadd.f32 %v426, %v523
      %v525 = vpop.f32.mrb[0].mxu0
      %v526 = vadd.f32 %v426, %v525
      %527 = vmatprep.mubr.f32.mxu0 0.0
      %528 = vmatmul.mubr.f32.gmra.mrb[0].mxu0 %v446
      %v529 = vpop.f32.mrb[0].mxu0
      %v530 = vadd.f32 %v431, %v529
      %v531 = vpop.f32.mrb[0].mxu0
      %v532 = vadd.f32 %v431, %v531
      %533 = vmatprep.mubr.f32.mxu0 0.0
      %534 = vmatmul.mubr.f32.gmra.mrb[0].mxu0 %v449
      %v535 = vpop.f32.mrb[0].mxu0
      %v536 = vadd.f32 %v436, %v535
      %v537 = vpop.f32.mrb[0].mxu0
      %v538 = vadd.f32 %v436, %v537
      %539 = vdwg.mxu0
      %v540 = vmul.f32 %v518, 0.5
      %v541 = vmul.f32 %v520, 0.5
      %v542 = vmul.f32 %v524, 0.5
      %v543 = vmul.f32 %v526, 0.5
      %v544 = vmul.f32 %v530, 0.5
      %v545 = vmul.f32 %v532, 0.5
      %v546 = vmul.f32 %v536, 0.5
      %v547 = vmul.f32 %v538, 0.5
      %v548 = vtanh.pop %v540
      %v549 = vtanh.pop %v541
      %v550 = vtanh.pop %v542
      %v551 = vtanh.pop %v543
      %v552 = vtanh.pop %v544
      %v553 = vtanh.pop %v545
      %v554 = vtanh.pop %v546
      %v555 = vtanh.pop %v547
      %v556 = vadd.f32 %v548, 1.0
      %v557 = vadd.f32 %v549, 1.0
      %v558 = vadd.f32 %v550, 1.0
      %v559 = vadd.f32 %v551, 1.0
      %v560 = vadd.f32 %v552, 1.0
      %v561 = vadd.f32 %v553, 1.0
      %v562 = vadd.f32 %v554, 1.0
      %v563 = vadd.f32 %v555, 1.0
      %v564 = vmul.f32 %v556, 0.5
      %v565 = vmul.f32 %v557, 0.5
      %v566 = vmul.f32 %v558, 0.5
      %v567 = vmul.f32 %v559, 0.5
      %v568 = vmul.f32 %v560, 0.5
      %v569 = vmul.f32 %v561, 0.5
      %v570 = vmul.f32 %v562, 0.5
      %v571 = vmul.f32 %v563, 0.5
      %572 = vst [vmem:[%s262] sm:$0xff] %v564
      %573 = vst [vmem:[%s262 + $0x8] sm:$0xff] %v565
      %574 = vst [vmem:[%s262 + $0x10] sm:$0xff] %v566
      %575 = vst [vmem:[%s262 + $0x18] sm:$0xff] %v567
      %576 = vst [vmem:[%s262 + $0x20] sm:$0xff] %v568
      %577 = vst [vmem:[%s262 + $0x28] sm:$0xff] %v569
      %578 = vst [vmem:[%s262 + $0x30] sm:$0xff] %v570
      %579 = vst [vmem:[%s262 + $0x38] sm:$0xff] %v571
      %s580 = smul.u32 2, %s21
      %p581 = scmp.lt.s32.totalorder %s20, 1
      %s582 = scalar_select %p581, %s20, 1
      %p583 = scmp.lt.s32.totalorder %s580, 1
      %s584 = scalar_select %p583, %s580, 1
      %s585 = smul.addr %s582, 8
      %s586 = sadd.s32 %s584, %s585
      %s587 = smul.addr %s586, 8
      %s588 = scalar_lea.vmem %s5, %s587
      // Predicated region
      $region41: #{ppn_conv_neck.1} parent=39 // pred_check
        %p589 = pneg %p160
      $region42: #{ppn_conv_neck.1} parent=39 // pred_check_branch
        %591 = sbr.rel (%p589) target = $region44
      $region43: #{ppn_conv_neck.1} parent=39 // pred_region
        %s592 = smul.u32 2, %s21
      $region44: #{ppn_conv_neck.1} parent=39 // pred_fallthru
        _
    $region40: #{ppn_conv_neck.1} parent=5 // pred_fallthru
      _
    %p593 = scmp.le.s32.totalorder 2, %s11
    // Predicated region
    $region45: #{ppn_conv_neck.1} parent=5 // pred_check
      %p594 = pneg %p593
    $region46: #{ppn_conv_neck.1} parent=5 // pred_check_branch
      %596 = sbr.rel (%p594) target = $region48
    $region47: #{ppn_conv_neck.1} parent=5 // pred_region
      %s597 = ssub.s32 %s11, 2
      // Predicated region
      $region49: #{ppn_conv_neck.1} parent=47 // pred_check
        %p598 = pneg %p166
      $region50: #{ppn_conv_neck.1} parent=47 // pred_check_branch
        %600 = sbr.rel (%p598) target = $region52
      $region51: #{ppn_conv_neck.1} parent=47 // pred_region
        %s601 = smul.u32 2, %s23
        %p602 = scmp.lt.s32.totalorder %s22, 1
        %s603 = scalar_select %p602, %s22, 1
        %p604 = scmp.lt.s32.totalorder %s601, 1
        %s605 = scalar_select %p604, %s601, 1
        %s606 = smul.addr %s603, 8
        %s607 = sadd.s32 %s605, %s606
        %s608 = smul.addr %s607, 8
        %s609 = scalar_lea.vmem %s5, %s608
      $region52: #{ppn_conv_neck.1} parent=47 // pred_fallthru
        _
    $region48: #{ppn_conv_neck.1} parent=5 // pred_fallthru
      _
  $region6: #{ppn_conv_neck.1} parent=0 // loop_footer
    %s15 = sadd.s32 1, %s11
  $region7: #{ppn_conv_neck.1} parent=0 // loop_footer_branch
    %10 = sbr.rel target = $region3
  $region8: #{ppn_conv_neck.1} parent=0 // loop_exit
    _

</llo_original>
